<compile_context>
chip_gen: v7x
topology: tpu7x:2x2x1
jax: 0.10.0
libtpu: 0.0.40
codegen_flags: <defaults>
</compile_context>

<pallas_src>
import functools

import jax
import jax.numpy as jnp
from jax.experimental import pallas as pl
from jax.experimental.pallas import tpu as pltpu

_MIB = 1024 * 1024


def _cdiv(a, b):
    return -(-a // b)


@functools.lru_cache(maxsize=1)
def _budgets():
    """Generation-aware budgets: (vmem_limit_bytes, target_block_bytes, two_tc)."""
    vmem_cap = None
    kind = ""
    try:
        vmem_cap = getattr(pltpu.get_tpu_info(), "vmem_capacity_bytes", None)
    except Exception:
        vmem_cap = None
    try:
        kind = jax.devices()[0].device_kind.lower()
    except Exception:
        kind = ""

    if kind:
        is_v7x = "v7" in kind
    elif vmem_cap:
        is_v7x = vmem_cap <= 96 * _MIB
    else:
        is_v7x = True                       # unknown: be conservative
    if not vmem_cap:
        vmem_cap = (64 if is_v7x else 128) * _MIB

    if is_v7x:                              # 64 MiB VMEM per TC, 2 TCs
        vmem_limit = min(vmem_cap - 8 * _MIB, 56 * _MIB)
        target = 6 * _MIB
    else:                                   # v5e / v6e: 128 MiB VMEM, 1 TC
        vmem_limit = min(vmem_cap - 16 * _MIB, 110 * _MIB)
        target = 16 * _MIB
    return int(vmem_limit), int(target), is_v7x


def _pick_bt(B, per_image_bytes, target_block_bytes, two_tc):
    """Batch tile for the fused path: biggest blocks first, then pipeline/balance.

    Ragged tails are allowed (grid = cdiv(B, bt)); per-row pooling and Pallas
    write-back clipping make partial batch blocks correct without masking.
    """
    bt_max = max(1, min(B, target_block_bytes // max(1, per_image_bytes)))
    steps = _cdiv(B, bt_max)
    # >=2 steps so in/out DMA pipelines; on 2-TC chips prefer an even, >=4-step
    # grid so both TensorCores get balanced work.
    min_steps = min(B, 4 if two_tc else 2)
    steps = max(steps, min_steps)
    if two_tc and B > 1 and steps % 2 and steps < B:
        steps += 1
    bt = _cdiv(B, steps)
    if two_tc and B > 1:
        # Small fix-up: if the realized grid length is odd, accept a slightly
        # smaller bt (never below half) that makes it even.
        for cand in range(bt, max(1, bt // 2) - 1, -1):
            if _cdiv(B, cand) % 2 == 0:
                bt = cand
                break
    return bt


# ------------------------- fused single-pass kernel -------------------------

def _ca_fused_kernel(x_ref, w1t_ref, b1_ref, w2t_ref, b2_ref, o_ref):
    # Pool in f32 (accuracy) WITHOUT binding a full-block f32 copy of x: the
    # (load -> convert -> reduce) chain stays fused, and the rescale multiply
    # below runs in the input dtype (bf16 VALU on v6e/v7x, no f32 VMEM temp).
    pooled = jnp.mean(x_ref[...].astype(jnp.float32), axis=-1)             # (Bt, C)
    h = jnp.dot(pooled, w1t_ref[...],
                preferred_element_type=jnp.float32) + b1_ref[...]          # (Bt, Cmid)
    h = jnp.maximum(h, 0.0)
    y = jnp.dot(h, w2t_ref[...],
                preferred_element_type=jnp.float32) + b2_ref[...]          # (Bt, C)
    scale = jax.nn.sigmoid(y).astype(o_ref.dtype)                          # (Bt, C)
    o_ref[...] = x_ref[...] * scale[:, :, None]


# --------------- split path: pooling kernel, then rescale -------------------

def _make_pool_kernel(hw_total, hwt, ns, ns_h, needs_mask):
    def kernel(x_ref, psum_ref):
        h = pl.program_id(1)
        s = pl.program_id(2)

        @pl.when(s == 0)
        def _():
            psum_ref[...] = jnp.zeros_like(psum_ref)

        x = x_ref[...].astype(jnp.float32)                                 # (bt, C, hwt)
        if needs_mask:  # static (trace-time) decision
            # Mask with the *unclamped* global offset, so steps whose block
            # index had to be clamped (fully out-of-range spatial chunks) and
            # the ragged trailing chunk both contribute exactly zero.
            off = (h * ns_h + s) * hwt
            lane = jax.lax.broadcasted_iota(jnp.int32, x.shape, dimension=2)
            x = jnp.where(off + lane < hw_total, x, 0.0)
        psum_ref[...] += jnp.sum(x, axis=-1)[None, :, :, None]             # (1, bt, C, 1)

    return kernel


def _rescale_kernel(x_ref, scale_ref, o_ref):
    # Pure lane-broadcast multiply in the input dtype: this pass is DMA-bound,
    # no block-sized f32 temp.
    o_ref[...] = x_ref[...] * scale_ref[...]


# --------------------------------- wrapper ----------------------------------

def channel_attention(x_nchw, w1, b1, w2, b2, *, target_block_bytes=None):
    """RCAN channel attention: x * sigmoid(conv2(relu(conv1(avgpool(x))))).

    Args:
      x_nchw: (B, C, H, W) input (NCHW, same as PyTorch).
      w1: (Cmid, C, 1, 1), b1: (Cmid,)   — first 1x1 conv.
      w2: (C, Cmid, 1, 1), b2: (C,)      — second 1x1 conv.
      target_block_bytes: optional override of the per-block VMEM budget
        (mainly for testing the split path on small shapes).
    """
    B, C, H, W = x_nchw.shape
    Cmid = w1.shape[0]
    HW = H * W
    itemsize = x_nchw.dtype.itemsize
    x_bytes = B * C * HW * itemsize

    vmem_limit, auto_target, two_tc = _budgets()
    target = int(target_block_bytes) if target_block_bytes is not None else auto_target

    x3 = x_nchw.reshape(B, C, HW)          # free: contiguous reshape, no transpose
    w1t = w1.reshape(Cmid, C).T            # (C, Cmid)   tiny one-off
    w2t = w2.reshape(C, Cmid).T            # (Cmid, C)
    b1r = b1.reshape(1, Cmid)
    b2r = b2.reshape(1, C)

    per_image = C * HW * itemsize
    fused = (per_image <= target) or (HW < 128)

    if fused:
        bt = _pick_bt(B, per_image, target, two_tc)
        w_specs = [
            pl.BlockSpec((C, Cmid), lambda b: (0, 0)),
            pl.BlockSpec((1, Cmid), lambda b: (0, 0)),
            pl.BlockSpec((Cmid, C), lambda b: (0, 0)),
            pl.BlockSpec((1, C), lambda b: (0, 0)),
        ]
        out3 = pl.pallas_call(
            _ca_fused_kernel,
            out_shape=jax.ShapeDtypeStruct((B, C, HW), x_nchw.dtype),
            grid_spec=pltpu.PrefetchScalarGridSpec(
                num_scalar_prefetch=0,
                grid=(_cdiv(B, bt),),
                in_specs=[pl.BlockSpec((bt, C, HW), lambda b: (b, 0, 0))] + w_specs,
                out_specs=pl.BlockSpec((bt, C, HW), lambda b: (b, 0, 0)),
            ),
            compiler_params=pltpu.CompilerParams(
                dimension_semantics=("parallel",),
                vmem_limit_bytes=vmem_limit),
            cost_estimate=pl.CostEstimate(
                flops=2 * B * C * HW + 4 * B * C * Cmid,
                transcendentals=B * C,
                bytes_accessed=2 * x_bytes),
        )(x3, w1t, b1r, w2t, b2r)
        return out3.reshape(B, C, H, W)

    # ---- split path: one image does not fit a VMEM block ----
    bt = 1
    nb = B
    hwt = (target // (C * itemsize)) // 128 * 128
    hwt = max(128, min(hwt, (HW // 128) * 128))
    ns = _cdiv(HW, hwt)
    # On 2-TC chips with a tiny batch, split the spatial reduction across both
    # cores; otherwise one TC streams the whole image and half the chip's HBM
    # bandwidth idles.
    nh = 2 if (two_tc and nb < 2 and ns >= 2) else 1
    ns_h = _cdiv(ns, nh)
    needs_mask = (HW % hwt != 0) or (nh * ns_h != ns)

    psum = pl.pallas_call(
        _make_pool_kernel(HW, hwt, ns, ns_h, needs_mask),
        out_shape=jax.ShapeDtypeStruct((nh, B, C, 1), jnp.float32),
        grid_spec=pltpu.PrefetchScalarGridSpec(
            num_scalar_prefetch=0,
            grid=(nb, nh, ns_h),
            in_specs=[pl.BlockSpec(
                (bt, C, hwt),
                lambda b, h, s: (b, 0, jnp.minimum(h * ns_h + s, ns - 1)))],
            out_specs=pl.BlockSpec((1, bt, C, 1), lambda b, h, s: (h, b, 0, 0)),
        ),
        compiler_params=pltpu.CompilerParams(
            dimension_semantics=("parallel", "parallel", "arbitrary"),
            vmem_limit_bytes=vmem_limit),
        cost_estimate=pl.CostEstimate(
            flops=B * C * HW, transcendentals=0,
            bytes_accessed=x_bytes + nh * B * C * 4),
    )(x3)

    # Tiny per-image MLP + sigmoid on the pooled vectors (B*C values): plain XLA.
    pooled = jnp.sum(psum[..., 0], axis=0) * (1.0 / float(HW))             # (B, C)
    hmid = jnp.maximum(jnp.dot(pooled, w1t) + b1r, 0.0)
    scale = jax.nn.sigmoid(jnp.dot(hmid, w2t) + b2r)                       # (B, C)
    scale3 = scale[:, :, None].astype(x_nchw.dtype)                        # (B, C, 1)

    # TODO(synk): for images only slightly above the fused threshold, a manual-DMA
    # variant (memory_space=pl.ANY + make_async_copy) could keep the image
    # resident across pool + rescale and drop this second HBM read of x.
    out3 = pl.pallas_call(
        _rescale_kernel,
        out_shape=jax.ShapeDtypeStruct((B, C, HW), x_nchw.dtype),
        grid_spec=pltpu.PrefetchScalarGridSpec(
            num_scalar_prefetch=0,
            grid=(nb, ns),
            in_specs=[
                pl.BlockSpec((bt, C, hwt), lambda b, s: (b, 0, s)),
                pl.BlockSpec((bt, C, 1), lambda b, s: (b, 0, 0)),
            ],
            out_specs=pl.BlockSpec((bt, C, hwt), lambda b, s: (b, 0, s)),
        ),
        compiler_params=pltpu.CompilerParams(
            dimension_semantics=("parallel", "parallel"),
            vmem_limit_bytes=vmem_limit),
        cost_estimate=pl.CostEstimate(
            flops=B * C * HW, transcendentals=0,
            bytes_accessed=2 * x_bytes + B * C * itemsize),
    )(x3, scale3)
    return out3.reshape(B, C, H, W)


def _reference(x, w1, b1, w2, b2):
    """Pure-JAX reference matching the PyTorch forward (NCHW)."""
    B, C, H, W = x.shape
    Cmid = w1.shape[0]
    pooled = jnp.mean(x, axis=(2, 3))                       # (B, C)
    h = jnp.maximum(pooled @ w1.reshape(Cmid, C).T + b1, 0.0)
    y = h @ w2.reshape(C, Cmid).T + b2                      # (B, C)
    scale = jax.nn.sigmoid(y)[:, :, None, None]
    return x * scale


if __name__ == "__main__":
    # Small shapes consistent with the module: num_feat=64, squeeze_factor=16.
    B, C, H, W = 2, 64, 16, 16
    squeeze_factor = 16
    Cmid = C // squeeze_factor

    key = jax.random.PRNGKey(0)
    kx, k1, kb1, k2, kb2 = jax.random.split(key, 5)

    x = jax.random.normal(kx, (B, C, H, W), dtype=jnp.float32)
    w1 = jax.random.normal(k1, (Cmid, C, 1, 1), dtype=jnp.float32) * 0.1
    b1 = jax.random.normal(kb1, (Cmid,), dtype=jnp.float32) * 0.1
    w2 = jax.random.normal(k2, (C, Cmid, 1, 1), dtype=jnp.float32) * 0.1
    b2 = jax.random.normal(kb2, (C,), dtype=jnp.float32) * 0.1

    ref = jax.block_until_ready(_reference(x, w1, b1, w2, b2))

    # 1) default (fused single-pass) path with generation-aware tiling
    out = jax.block_until_ready(channel_attention(x, w1, b1, w2, b2))
    assert out.shape == (B, C, H, W)
    assert jnp.allclose(out, ref, atol=1e-5, rtol=1e-5), "fused path mismatch"

    # 2) fused path with a non-dividing batch (ragged batch tail on 1-TC chips)
    x3b = jax.random.normal(kx, (3, C, H, W), dtype=jnp.float32)
    ref3b = jax.block_until_ready(_reference(x3b, w1, b1, w2, b2))
    out3b = jax.block_until_ready(channel_attention(x3b, w1, b1, w2, b2))
    assert jnp.allclose(out3b, ref3b, atol=1e-5, rtol=1e-5), "ragged batch mismatch"

    # 3) force the split (spatially tiled) path on the same small input
    out_split = jax.block_until_ready(
        channel_attention(x, w1, b1, w2, b2, target_block_bytes=32 * 1024))
    assert jnp.allclose(out_split, ref, atol=1e-5, rtol=1e-5), "split path mismatch"

    # 4) split path with a ragged spatial tail (HW=144 not a multiple of 128)
    H2 = W2 = 12
    x2 = jax.random.normal(kx, (1, C, H2, W2), dtype=jnp.float32)
    ref2 = jax.block_until_ready(_reference(x2, w1, b1, w2, b2))
    out2 = jax.block_until_ready(
        channel_attention(x2, w1, b1, w2, b2, target_block_bytes=16 * 1024))
    assert jnp.allclose(out2, ref2, atol=1e-5, rtol=1e-5), "masked tail mismatch"

    print("KERNEL_OK")
</pallas_src>

<mosaic_0001>
module attributes {stable_mosaic.version = 11 : i64} {
  func.func @_ca_fused_kernel(%arg0: i32, %arg1: memref<1x64x256xf32, #tpu.memory_space<vmem>>, %arg2: memref<64x4xf32, #tpu.memory_space<vmem>>, %arg3: memref<1x4xf32, #tpu.memory_space<vmem>>, %arg4: memref<4x64xf32, #tpu.memory_space<vmem>>, %arg5: memref<1x64xf32, #tpu.memory_space<vmem>>, %arg6: memref<1x64x256xf32, #tpu.memory_space<vmem>>) attributes {dimension_semantics = [#tpu.dimension_semantics<parallel>], iteration_bounds = array<i64: 2>, scalar_prefetch = 0 : i64, scratch_operands = 0 : i64, tpu.core_type = #tpu.core_type<tc>, window_params = [{transform_indices = @transform_0, window_bounds = array<i64: 1, 64, 256>}, {pipeline_mode = #tpu.pipeline_mode<synchronous>, transform_indices = @transform_1, window_bounds = array<i64: 64, 4>}, {pipeline_mode = #tpu.pipeline_mode<synchronous>, transform_indices = @transform_2, window_bounds = array<i64: 1, 4>}, {pipeline_mode = #tpu.pipeline_mode<synchronous>, transform_indices = @transform_3, window_bounds = array<i64: 4, 64>}, {pipeline_mode = #tpu.pipeline_mode<synchronous>, transform_indices = @transform_4, window_bounds = array<i64: 1, 64>}, {transform_indices = @transform_5, window_bounds = array<i64: 1, 64, 256>}]} {
    %c0 = arith.constant 0 : index
    %c0_0 = arith.constant 0 : index
    %c0_1 = arith.constant 0 : index
    %0 = vector.load %arg1[%c0, %c0_0, %c0_1] : memref<1x64x256xf32, #tpu.memory_space<vmem>>, vector<1x64x256xf32>
    %cst = arith.constant dense<0.000000e+00> : vector<1x64xf32>
    %1 = vector.multi_reduction <add>, %0, %cst [2] : vector<1x64x256xf32> to vector<1x64xf32>
    %cst_2 = arith.constant 2.560000e+02 : f32
    %2 = vector.broadcast %cst_2 : f32 to vector<1x64xf32>
    %3 = arith.divf %1, %2 : vector<1x64xf32>
    %c0_3 = arith.constant 0 : index
    %c0_4 = arith.constant 0 : index
    %4 = vector.load %arg2[%c0_3, %c0_4] : memref<64x4xf32, #tpu.memory_space<vmem>>, vector<64x4xf32>
    %cst_5 = arith.constant dense<0.000000e+00> : vector<1x4xf32>
    %5 = tpu.matmul %3, %4, %cst_5 {dimension_numbers = #tpu.dot_dimension_numbers<[1], [0], [0], [1], [0, 0, 1, 1], [], []>} : vector<1x64xf32>, vector<64x4xf32>, vector<1x4xf32> -> vector<1x4xf32>
    %c0_6 = arith.constant 0 : index
    %c0_7 = arith.constant 0 : index
    %6 = vector.load %arg3[%c0_6, %c0_7] : memref<1x4xf32, #tpu.memory_space<vmem>>, vector<1x4xf32>
    %7 = arith.addf %5, %6 : vector<1x4xf32>
    %cst_8 = arith.constant 0.000000e+00 : f32
    %8 = vector.broadcast %cst_8 : f32 to vector<1x4xf32>
    %9 = arith.maximumf %7, %8 : vector<1x4xf32>
    %c0_9 = arith.constant 0 : index
    %c0_10 = arith.constant 0 : index
    %10 = vector.load %arg4[%c0_9, %c0_10] : memref<4x64xf32, #tpu.memory_space<vmem>>, vector<4x64xf32>
    %cst_11 = arith.constant dense<0.000000e+00> : vector<1x64xf32>
    %11 = tpu.matmul %9, %10, %cst_11 {dimension_numbers = #tpu.dot_dimension_numbers<[1], [0], [0], [1], [0, 0, 1, 1], [], []>} : vector<1x4xf32>, vector<4x64xf32>, vector<1x64xf32> -> vector<1x64xf32>
    %c0_12 = arith.constant 0 : index
    %c0_13 = arith.constant 0 : index
    %12 = vector.load %arg5[%c0_12, %c0_13] : memref<1x64xf32, #tpu.memory_space<vmem>>, vector<1x64xf32>
    %13 = arith.addf %11, %12 : vector<1x64xf32>
    %14 = arith.negf %13 : vector<1x64xf32>
    %15 = math.exp %14 : vector<1x64xf32>
    %cst_14 = arith.constant 1.000000e+00 : f32
    %16 = vector.broadcast %cst_14 : f32 to vector<1x64xf32>
    %17 = arith.addf %16, %15 : vector<1x64xf32>
    %18 = arith.divf %16, %17 : vector<1x64xf32>
    %c0_15 = arith.constant 0 : index
    %c0_16 = arith.constant 0 : index
    %c0_17 = arith.constant 0 : index
    %19 = vector.load %arg1[%c0_15, %c0_16, %c0_17] : memref<1x64x256xf32, #tpu.memory_space<vmem>>, vector<1x64x256xf32>
    %20 = vector.shape_cast %18 : vector<1x64xf32> to vector<1x64x1xf32>
    %21 = vector.broadcast %20 : vector<1x64x1xf32> to vector<1x64x256xf32>
    %22 = arith.mulf %19, %21 : vector<1x64x256xf32>
    %c0_18 = arith.constant 0 : index
    %c0_19 = arith.constant 0 : index
    %c0_20 = arith.constant 0 : index
    %23 = vector.load %arg6[%c0_18, %c0_19, %c0_20] : memref<1x64x256xf32, #tpu.memory_space<vmem>>, vector<1x64x256xf32>
    tpu.vector_store %arg6[%c0_18, %c0_19, %c0_20], %22 {strides = array<i32>} : memref<1x64x256xf32, #tpu.memory_space<vmem>>, vector<1x64x256xf32>,
    return
  }
  func.func @transform_0(%arg0: i32) -> (i32, i32, i32) {
    %c0_i32 = arith.constant 0 : i32
    %c0_i32_0 = arith.constant 0 : i32
    %c0_i32_1 = arith.constant 0 : i32
    return %arg0, %c0_i32, %c0_i32_0 : i32, i32, i32
  }
  func.func @transform_1(%arg0: i32) -> (i32, i32) {
    %c0_i32 = arith.constant 0 : i32
    %c0_i32_0 = arith.constant 0 : i32
    %c0_i32_1 = arith.constant 0 : i32
    return %c0_i32, %c0_i32_0 : i32, i32
  }
  func.func @transform_2(%arg0: i32) -> (i32, i32) {
    %c0_i32 = arith.constant 0 : i32
    %c0_i32_0 = arith.constant 0 : i32
    %c0_i32_1 = arith.constant 0 : i32
    return %c0_i32, %c0_i32_0 : i32, i32
  }
  func.func @transform_3(%arg0: i32) -> (i32, i32) {
    %c0_i32 = arith.constant 0 : i32
    %c0_i32_0 = arith.constant 0 : i32
    %c0_i32_1 = arith.constant 0 : i32
    return %c0_i32, %c0_i32_0 : i32, i32
  }
  func.func @transform_4(%arg0: i32) -> (i32, i32) {
    %c0_i32 = arith.constant 0 : i32
    %c0_i32_0 = arith.constant 0 : i32
    %c0_i32_1 = arith.constant 0 : i32
    return %c0_i32, %c0_i32_0 : i32, i32
  }
  func.func @transform_5(%arg0: i32) -> (i32, i32, i32) {
    %c0_i32 = arith.constant 0 : i32
    %c0_i32_0 = arith.constant 0 : i32
    %c0_i32_1 = arith.constant 0 : i32
    return %arg0, %c0_i32, %c0_i32_0 : i32, i32, i32
  }
}

</mosaic_0001>

<llo_original>
// kernel: tpu_custom_call.1
$region0: #{tpu_custom_call.1}
  #allocation0 [shape = 'u32[]', space=smem, size = 0x4, offset = 0x4, fixed_abs, tag = 'smem constant byte address 0x4 - core index']
  #allocation1 [shape = 'u32[144,128]{1,0:T(1,128)}', space=vmem, size = 0x12000, scoped, tag = 'internal scratch']
  %s0 = inlined_call_operand.hbm [shape: f32[2,64,256], index: 0, kind: input, shape index: {}]
  %s1 = inlined_call_operand.hbm [shape: f32[64,4], index: 1, kind: input, shape index: {}]
  %s2 = inlined_call_operand.hbm [shape: f32[1,4], index: 2, kind: input, shape index: {}]
  %s3 = inlined_call_operand.hbm [shape: f32[4,64], index: 3, kind: input, shape index: {}]
  %s4 = inlined_call_operand.hbm [shape: f32[1,64], index: 4, kind: input, shape index: {}]
  %s5 = inlined_call_operand.hbm [shape: f32[2,64,256], index: 5, kind: output, shape index: {}]
  %s6 = sld [smem:[#allocation0]]
  $region73: #{tpu_custom_call.1} parent=0
    _
  %s8 = ssub.s32 1, %s6
  %s9 = scalar_select 0, %s8, %s6
  $region1: #{tpu_custom_call.1} parent=0
    #allocation2 [shape = 'u8[131072]{0}', space=vmem, size = 0x20000, scoped, tag = 'input window, operand 0']
    #allocation3 [shape = 's32[2]{0}', space=sflag, size = 0x8, scoped, tag = 'scoped memory for tpu_custom_call.1']
    #allocation4 [shape = 's32[2]{0}', space=sflag, size = 0x8, scoped, tag = 'scoped memory for tpu_custom_call.1']
    #allocation5 [shape = 'u8[32768]{0}', space=vmem, size = 0x8000, scoped, tag = 'input window, operand 1, single buffered']
    #allocation6 [shape = 's32[1]{0}', space=sflag, size = 0x4, scoped, tag = 'scoped memory for tpu_custom_call.1']
    #allocation7 [shape = 'u8[512]{0}', space=vmem, size = 0x400, scoped, tag = 'input window, operand 2, single buffered']
    #allocation8 [shape = 'u8[2048]{0}', space=vmem, size = 0x800, scoped, tag = 'input window, operand 3, single buffered']
    #allocation9 [shape = 's32[1]{0}', space=sflag, size = 0x4, scoped, tag = 'scoped memory for tpu_custom_call.1']
    #allocation10 [shape = 'u8[512]{0}', space=vmem, size = 0x400, scoped, tag = 'input window, operand 4, single buffered']
    #allocation11 [shape = 'u8[131072]{0}', space=vmem, size = 0x20000, scoped, tag = 'output window, operand 0']
    %10 = vsyncpa [#allocation3], 0
    %s11 = scalar_lea.sflag [#allocation3], 1
    %12 = vsyncpa %s11, 0
    %13 = vsyncpa [#allocation6], 0
    %14 = vsyncpa [#allocation9], 0
    %15 = vsyncpa [#allocation4], 0
    %s16 = scalar_lea.sflag [#allocation4], 1
    %17 = vsyncpa %s16, 0
    loop: start=0, step=1, limit=4
    $region2: #{tpu_custom_call.1} parent=1 // loop_pre_header
      _
    $region3: #{tpu_custom_call.1} parent=1 // loop_header
      %s19 = sphi 0, %s23
      %p20 = scmp.ge.s32.totalorder %s19, 4
      %s29 = sphi 0, %s31
      %s32 = sphi 0, %s29
      %s33 = sphi 0, %s32
      %s49 = sphi 0, %s33
      %s53 = sphi 0, %s53
      %s55 = sphi 0, %s53
      %s56 = sphi 0, %s55
      %s70 = sphi 0, %s56
      %s74 = sphi 0, %s74
      %s76 = sphi 0, %s74
      %s77 = sphi 0, %s76
      %s91 = sphi 0, %s77
      %s95 = sphi 0, %s95
      %s97 = sphi 0, %s95
      %s98 = sphi 0, %s97
      %s112 = sphi 0, %s98
      %s116 = sphi 0, %s116
      %s118 = sphi 0, %s116
      %s119 = sphi 0, %s118
      %s133 = sphi 0, %s119
      %s139 = sphi 0, %s141
      %s142 = sphi 0, %s139
      %s143 = sphi 0, %s142
      %s159 = sphi 0, %s143
    $region4: #{tpu_custom_call.1} parent=1 // loop_header_branch
      %22 = sbr.rel (%p20) target = $region8
    $region5: #{tpu_custom_call.1} parent=1 // loop_body
      %s24 = ssub.s32 %s19, 1
      %s25 = ssub.s32 %s19, 2
      %s26 = sadd.s32 %s19, 1
      %s27 = ssub.s32 %s19, %s26
      %p28 = scmp.eq.s32.totalorder %s27, 0
      %s30 = sadd.s32 %s29, 1
      %s31 = scalar_select %p28, %s29, %s30
      %p34 = pneg %p28
      %p35 = scmp.eq.s32.totalorder %s19, 1
      %p36 = por %p34, %p35
      %p37 = scmp.ne.s32.totalorder %s29, %s32
      %p38 = scmp.eq.s32.totalorder %s19, 0
      %p39 = por %p37, %p38
      %p40 = scmp.ne.s32.totalorder %s29, %s32
      %p41 = scmp.eq.s32.totalorder %s24, 1
      %p42 = por %p40, %p41
      %p43 = scmp.ne.s32.totalorder %s32, %s33
      %p44 = scmp.eq.s32.totalorder %s24, 0
      %p45 = por %p43, %p44
      %p46 = scmp.ne.s32.totalorder %s32, %s33
      %p47 = scmp.eq.s32.totalorder %s25, 1
      %p48 = por %p46, %p47
      %p50 = scmp.ne.s32.totalorder %s33, %s49
      %p51 = scmp.eq.s32.totalorder %s25, 0
      %p52 = por %p50, %p51
      %s54 = sadd.s32 %s53, 1
      %p57 = scmp.eq.s32.totalorder %s19, 1
      %p58 = scmp.ne.s32.totalorder %s53, %s55
      %p59 = scmp.eq.s32.totalorder %s19, 0
      %p60 = por %p58, %p59
      %p61 = scmp.ne.s32.totalorder %s53, %s55
      %p62 = scmp.eq.s32.totalorder %s24, 1
      %p63 = por %p61, %p62
      %p64 = scmp.ne.s32.totalorder %s55, %s56
      %p65 = scmp.eq.s32.totalorder %s24, 0
      %p66 = por %p64, %p65
      %p67 = scmp.ne.s32.totalorder %s55, %s56
      %p68 = scmp.eq.s32.totalorder %s25, 1
      %p69 = por %p67, %p68
      %p71 = scmp.ne.s32.totalorder %s56, %s70
      %p72 = scmp.eq.s32.totalorder %s25, 0
      %p73 = por %p71, %p72
      %s75 = sadd.s32 %s74, 1
      %p78 = scmp.eq.s32.totalorder %s19, 1
      %p79 = scmp.ne.s32.totalorder %s74, %s76
      %p80 = scmp.eq.s32.totalorder %s19, 0
      %p81 = por %p79, %p80
      %p82 = scmp.ne.s32.totalorder %s74, %s76
      %p83 = scmp.eq.s32.totalorder %s24, 1
      %p84 = por %p82, %p83
      %p85 = scmp.ne.s32.totalorder %s76, %s77
      %p86 = scmp.eq.s32.totalorder %s24, 0
      %p87 = por %p85, %p86
      %p88 = scmp.ne.s32.totalorder %s76, %s77
      %p89 = scmp.eq.s32.totalorder %s25, 1
      %p90 = por %p88, %p89
      %p92 = scmp.ne.s32.totalorder %s77, %s91
      %p93 = scmp.eq.s32.totalorder %s25, 0
      %p94 = por %p92, %p93
      %s96 = sadd.s32 %s95, 1
      %p99 = scmp.eq.s32.totalorder %s19, 1
      %p100 = scmp.ne.s32.totalorder %s95, %s97
      %p101 = scmp.eq.s32.totalorder %s19, 0
      %p102 = por %p100, %p101
      %p103 = scmp.ne.s32.totalorder %s95, %s97
      %p104 = scmp.eq.s32.totalorder %s24, 1
      %p105 = por %p103, %p104
      %p106 = scmp.ne.s32.totalorder %s97, %s98
      %p107 = scmp.eq.s32.totalorder %s24, 0
      %p108 = por %p106, %p107
      %p109 = scmp.ne.s32.totalorder %s97, %s98
      %p110 = scmp.eq.s32.totalorder %s25, 1
      %p111 = por %p109, %p110
      %p113 = scmp.ne.s32.totalorder %s98, %s112
      %p114 = scmp.eq.s32.totalorder %s25, 0
      %p115 = por %p113, %p114
      %s117 = sadd.s32 %s116, 1
      %p120 = scmp.eq.s32.totalorder %s19, 1
      %p121 = scmp.ne.s32.totalorder %s116, %s118
      %p122 = scmp.eq.s32.totalorder %s19, 0
      %p123 = por %p121, %p122
      %p124 = scmp.ne.s32.totalorder %s116, %s118
      %p125 = scmp.eq.s32.totalorder %s24, 1
      %p126 = por %p124, %p125
      %p127 = scmp.ne.s32.totalorder %s118, %s119
      %p128 = scmp.eq.s32.totalorder %s24, 0
      %p129 = por %p127, %p128
      %p130 = scmp.ne.s32.totalorder %s118, %s119
      %p131 = scmp.eq.s32.totalorder %s25, 1
      %p132 = por %p130, %p131
      %p134 = scmp.ne.s32.totalorder %s119, %s133
      %p135 = scmp.eq.s32.totalorder %s25, 0
      %p136 = por %p134, %p135
      %s137 = ssub.s32 %s19, %s26
      %p138 = scmp.eq.s32.totalorder %s137, 0
      %s140 = sadd.s32 %s139, 1
      %s141 = scalar_select %p138, %s139, %s140
      %p144 = pneg %p138
      %p145 = scmp.eq.s32.totalorder %s19, 1
      %p146 = por %p144, %p145
      %p147 = scmp.ne.s32.totalorder %s139, %s142
      %p148 = scmp.eq.s32.totalorder %s19, 0
      %p149 = por %p147, %p148
      %p150 = scmp.ne.s32.totalorder %s139, %s142
      %p151 = scmp.eq.s32.totalorder %s24, 1
      %p152 = por %p150, %p151
      %p153 = scmp.ne.s32.totalorder %s142, %s143
      %p154 = scmp.eq.s32.totalorder %s24, 0
      %p155 = por %p153, %p154
      %p156 = scmp.ne.s32.totalorder %s142, %s143
      %p157 = scmp.eq.s32.totalorder %s25, 1
      %p158 = por %p156, %p157
      %p160 = scmp.ne.s32.totalorder %s143, %s159
      %p161 = scmp.eq.s32.totalorder %s25, 0
      %p162 = por %p160, %p161
      %p163 = scmp.le.s32.totalorder 1, %s19
      %p164 = scmp.lt.s32.totalorder %s19, 3
      %p165 = pnand %p163, %p164
      %p166 = pneg %p165
      // Predicated region
      $region9: #{tpu_custom_call.1} parent=5 // pred_check
        _
      $region10: #{tpu_custom_call.1} parent=5 // pred_check_branch
        %168 = sbr.rel (%p165) target = $region12
      $region11: #{tpu_custom_call.1} parent=5 // pred_region
        %s169 = ssub.s32 %s19, 1
        // Predicated region
        $region13: #{tpu_custom_call.1} parent=11 // pred_check
          %p170 = pneg %p66
        $region14: #{tpu_custom_call.1} parent=11 // pred_check_branch
          %172 = sbr.rel (%p170) target = $region16
        $region15: #{tpu_custom_call.1} parent=11 // pred_region
          %s174 = ssub.s32 1024, 1024
          %175 = vsyncadd [#allocation6], %s174
          %s176 = sshll.u32 [#allocation5], 4
          %s177 = int_to_ptr.vmem [resolvable:$true] %s176
          %182 = dma.hbm_to_vmem [thread:$0]  %s1, 1024, %s177, [#allocation6], 128, 128, 8
        $region16: #{tpu_custom_call.1} parent=11 // pred_fallthru
          _
        // Predicated region
        $region17: #{tpu_custom_call.1} parent=11 // pred_check
          %p183 = pneg %p87
        $region18: #{tpu_custom_call.1} parent=11 // pred_check_branch
          %185 = sbr.rel (%p183) target = $region20
        $region19: #{tpu_custom_call.1} parent=11 // pred_region
          %s187 = ssub.s32 16, 16
          %188 = vsyncadd [#allocation6], %s187
          %s190 = sshll.u32 [#allocation7], 4
          %s191 = int_to_ptr.vmem [resolvable:$true] %s190
          %193 = dma.hbm_to_vmem [thread:$0]  %s2, 16, %s191, [#allocation6]
        $region20: #{tpu_custom_call.1} parent=11 // pred_fallthru
          _
        // Predicated region
        $region21: #{tpu_custom_call.1} parent=11 // pred_check
          %p194 = pneg %p108
        $region22: #{tpu_custom_call.1} parent=11 // pred_check_branch
          %196 = sbr.rel (%p194) target = $region24
        $region23: #{tpu_custom_call.1} parent=11 // pred_region
          %s198 = ssub.s32 64, 64
          %199 = vsyncadd [#allocation9], %s198
          %s201 = sshll.u32 [#allocation8], 4
          %s202 = int_to_ptr.vmem [resolvable:$true] %s201
          %204 = dma.hbm_to_vmem [thread:$0]  %s3, 64, %s202, [#allocation9]
        $region24: #{tpu_custom_call.1} parent=11 // pred_fallthru
          _
        // Predicated region
        $region25: #{tpu_custom_call.1} parent=11 // pred_check
          %p205 = pneg %p129
        $region26: #{tpu_custom_call.1} parent=11 // pred_check_branch
          %207 = sbr.rel (%p205) target = $region28
        $region27: #{tpu_custom_call.1} parent=11 // pred_region
          %s209 = ssub.s32 16, 16
          %210 = vsyncadd [#allocation9], %s209
          %s212 = sshll.u32 [#allocation10], 4
          %s213 = int_to_ptr.vmem [resolvable:$true] %s212
          %215 = dma.hbm_to_vmem [thread:$0]  %s4, 16, %s213, [#allocation9]
        $region28: #{tpu_custom_call.1} parent=11 // pred_fallthru
          _
      $region12: #{tpu_custom_call.1} parent=5 // pred_fallthru
        _
      %p216 = scmp.lt.s32.totalorder %s19, 2
      // Predicated region
      $region29: #{tpu_custom_call.1} parent=5 // pred_check
        %p217 = pneg %p216
      $region30: #{tpu_custom_call.1} parent=5 // pred_check_branch
        %219 = sbr.rel (%p217) target = $region32
      $region31: #{tpu_custom_call.1} parent=5 // pred_region
        // Predicated region
        $region33: #{tpu_custom_call.1} parent=31 // pred_check
          %p220 = pneg %p39
        $region34: #{tpu_custom_call.1} parent=31 // pred_check_branch
          %222 = sbr.rel (%p220) target = $region36
        $region35: #{tpu_custom_call.1} parent=31 // pred_region
          %s223 = sand.u32 %s29, 1
          %s224 = scalar_lea.sflag [#allocation3], %s223
          %s225 = sand.u32 %s29, 1
          %s226 = smul.addr %s225, 128
          %s227 = scalar_lea.vmem [#allocation2], %s226
          %s229 = ssub.s32 2048, 2048
          %230 = vsyncadd %s224, %s229
          %s231 = smul.addr %s19, 16
          %s232 = smul.addr %s231, 128
          %s233 = scalar_lea.hbm %s0, %s232
          %s234 = sshll.u32 %s227, 4
          %s235 = int_to_ptr.vmem [resolvable:$true] %s234
          %240 = dma.hbm_to_vmem [thread:$0]  %s233, 2048, %s235, %s224, 256, 256, 16
        $region36: #{tpu_custom_call.1} parent=31 // pred_fallthru
          _
      $region32: #{tpu_custom_call.1} parent=5 // pred_fallthru
        _
      %p241 = scmp.le.s32.totalorder 1, %s19
      %p242 = scmp.lt.s32.totalorder %s19, 3
      %p243 = pnand %p241, %p242
      %p244 = pneg %p243
      // Predicated region
      $region37: #{tpu_custom_call.1} parent=5 // pred_check
        _
      $region38: #{tpu_custom_call.1} parent=5 // pred_check_branch
        %246 = sbr.rel (%p243) target = $region40
      $region39: #{tpu_custom_call.1} parent=5 // pred_region
        %s247 = ssub.s32 %s19, 1
        %s248 = sand.u32 %s32, 1
        %s249 = scalar_lea.sflag [#allocation3], %s248
        %s250 = sand.u32 %s32, 1
        %s251 = smul.addr %s250, 128
        %s252 = scalar_lea.vmem [#allocation2], %s251
        // Predicated region
        $region41: #{tpu_custom_call.1} parent=39 // pred_check
          %p253 = pneg %p45
        $region42: #{tpu_custom_call.1} parent=39 // pred_check_branch
          %255 = sbr.rel (%p253) target = $region44
        $region43: #{tpu_custom_call.1} parent=39 // pred_region
          %256 = dma.done %s249, 2048
        $region44: #{tpu_custom_call.1} parent=39 // pred_fallthru
          _
        // Predicated region
        $region45: #{tpu_custom_call.1} parent=39 // pred_check
          %p257 = pneg %p66
        $region46: #{tpu_custom_call.1} parent=39 // pred_check_branch
          %259 = sbr.rel (%p257) target = $region48
        $region47: #{tpu_custom_call.1} parent=39 // pred_region
          %260 = dma.done [#allocation6], 1024
        $region48: #{tpu_custom_call.1} parent=39 // pred_fallthru
          _
        // Predicated region
        $region49: #{tpu_custom_call.1} parent=39 // pred_check
          %p261 = pneg %p87
        $region50: #{tpu_custom_call.1} parent=39 // pred_check_branch
          %263 = sbr.rel (%p261) target = $region52
        $region51: #{tpu_custom_call.1} parent=39 // pred_region
          %264 = dma.done [#allocation6], 16
        $region52: #{tpu_custom_call.1} parent=39 // pred_fallthru
          _
        // Predicated region
        $region53: #{tpu_custom_call.1} parent=39 // pred_check
          %p265 = pneg %p108
        $region54: #{tpu_custom_call.1} parent=39 // pred_check_branch
          %267 = sbr.rel (%p265) target = $region56
        $region55: #{tpu_custom_call.1} parent=39 // pred_region
          %268 = dma.done [#allocation9], 64
        $region56: #{tpu_custom_call.1} parent=39 // pred_fallthru
          _
        // Predicated region
        $region57: #{tpu_custom_call.1} parent=39 // pred_check
          %p269 = pneg %p129
        $region58: #{tpu_custom_call.1} parent=39 // pred_check_branch
          %271 = sbr.rel (%p269) target = $region60
        $region59: #{tpu_custom_call.1} parent=39 // pred_region
          %272 = dma.done [#allocation9], 16
        $region60: #{tpu_custom_call.1} parent=39 // pred_fallthru
          _
        %s273 = sand.u32 %s32, 1
        %s274 = scalar_lea.sflag [#allocation3], %s273
        %s275 = sand.u32 %s32, 1
        %s276 = smul.addr %s275, 128
        %s277 = scalar_lea.vmem [#allocation2], %s276
        %p278 = pneg %p45
        %p279 = pneg %p42
        %p280 = pneg %p66
        %p281 = pneg %p63
        %p282 = pneg %p87
        %p283 = pneg %p84
        %p284 = pneg %p108
        %p285 = pneg %p105
        %p286 = pneg %p129
        %p287 = pneg %p126
        %p288 = pneg %p155
        %p289 = pneg %p152
        %s290 = sand.u32 %s142, 1
        %s291 = scalar_lea.sflag [#allocation4], %s290
        %s292 = sand.u32 %s142, 1
        %s293 = smul.addr %s292, 128
        %s294 = scalar_lea.vmem [#allocation11], %s293
        %v295 = vld [vmem:[%s252] sm:$0xff]
        %v296 = vld [vmem:[%s252 + $0x8] sm:$0xff]
        %v297 = vld [vmem:[%s252 + $0x10] sm:$0xff]
        %v298 = vld [vmem:[%s252 + $0x18] sm:$0xff]
        %v299 = vld [vmem:[%s252 + $0x20] sm:$0xff]
        %v300 = vld [vmem:[%s252 + $0x28] sm:$0xff]
        %v301 = vld [vmem:[%s252 + $0x30] sm:$0xff]
        %v302 = vld [vmem:[%s252 + $0x38] sm:$0xff]
        %v303 = vld [vmem:[%s252 + $0x40] sm:$0xff]
        %v304 = vld [vmem:[%s252 + $0x48] sm:$0xff]
        %v305 = vld [vmem:[%s252 + $0x50] sm:$0xff]
        %v306 = vld [vmem:[%s252 + $0x58] sm:$0xff]
        %v307 = vld [vmem:[%s252 + $0x60] sm:$0xff]
        %v308 = vld [vmem:[%s252 + $0x68] sm:$0xff]
        %v309 = vld [vmem:[%s252 + $0x70] sm:$0xff]
        %v310 = vld [vmem:[%s252 + $0x78] sm:$0xff]
        %v311 = vadd.f32 %v295, %v296
        %312 = vadd.xlane.f32.xlu0 %v311
        %v313 = vpop.xlane.xlu0 %312
        %v314 = vadd.f32 %v297, %v298
        %315 = vadd.xlane.f32.xlu0 %v314
        %v316 = vpop.xlane.xlu0 %315
        %v317 = vadd.f32 %v299, %v300
        %318 = vadd.xlane.f32.xlu0 %v317
        %v319 = vpop.xlane.xlu0 %318
        %v320 = vadd.f32 %v301, %v302
        %321 = vadd.xlane.f32.xlu0 %v320
        %v322 = vpop.xlane.xlu0 %321
        %v323 = vadd.f32 %v303, %v304
        %324 = vadd.xlane.f32.xlu0 %v323
        %v325 = vpop.xlane.xlu0 %324
        %v326 = vadd.f32 %v305, %v306
        %327 = vadd.xlane.f32.xlu0 %v326
        %v328 = vpop.xlane.xlu0 %327
        %v329 = vadd.f32 %v307, %v308
        %330 = vadd.xlane.f32.xlu0 %v329
        %v331 = vpop.xlane.xlu0 %330
        %v332 = vadd.f32 %v309, %v310
        %333 = vadd.xlane.f32.xlu0 %v332
        %v334 = vpop.xlane.xlu0 %333
        %v335 = vrcp.pop 256.0
        %v336 = vmul.f32 %v313, %v335
        %v337 = vmul.f32 %v316, %v335
        %v338 = vmul.f32 %v319, %v335
        %v339 = vmul.f32 %v322, %v335
        %v340 = vmul.f32 %v325, %v335
        %v341 = vmul.f32 %v328, %v335
        %v342 = vmul.f32 %v331, %v335
        %v343 = vmul.f32 %v334, %v335
        %v344 = vld [vmem:[#allocation5] sm:$0xff]
        %v345 = vld [vmem:[#allocation5 + $0x8] sm:$0xff]
        %v346 = vld [vmem:[#allocation5 + $0x10] sm:$0xff]
        %v347 = vld [vmem:[#allocation5 + $0x18] sm:$0xff]
        %v348 = vld [vmem:[#allocation5 + $0x20] sm:$0xff]
        %v349 = vld [vmem:[#allocation5 + $0x28] sm:$0xff]
        %v350 = vld [vmem:[#allocation5 + $0x30] sm:$0xff]
        %v351 = vld [vmem:[#allocation5 + $0x38] sm:$0xff]
        %v352 = vld [vmem:[#allocation7] sm:$0x1]
        %v361 = vlaneseq
        %v362 = vand.u32 %v361, 127
        %v363 = vlaneseq
        %v364 = vshrl.u32 %v363, 7
        %v365 = vsub.s32 %v362, %v364
        %v366 = vrot.slane %v336, %v365
        %v367 = vadd.s32 %v362, 4294967288
        %v368 = vlaneseq
        %v369 = vshrl.u32 %v368, 7
        %v370 = vsub.s32 %v367, %v369
        %v371 = vrot.slane %v337, %v370
        %vm372 = vcmask 130112
        %v373 = vsel %vm372, %v371, %v366
        %v374 = vadd.s32 %v362, 4294967280
        %v375 = vlaneseq
        %v376 = vshrl.u32 %v375, 7
        %v377 = vsub.s32 %v374, %v376
        %v378 = vrot.slane %v338, %v377
        %vm379 = vcmask 195712
        %v380 = vsel %vm379, %v378, %v373
        %v381 = vadd.s32 %v362, 4294967272
        %v382 = vlaneseq
        %v383 = vshrl.u32 %v382, 7
        %v384 = vsub.s32 %v381, %v383
        %v385 = vrot.slane %v339, %v384
        %vm386 = vcmask 261312
        %v387 = vsel %vm386, %v385, %v380
        %v388 = vadd.s32 %v362, 4294967264
        %v389 = vlaneseq
        %v390 = vshrl.u32 %v389, 7
        %v391 = vsub.s32 %v388, %v390
        %v392 = vrot.slane %v340, %v391
        %vm393 = vcmask 326912
        %v394 = vsel %vm393, %v392, %v387
        %v395 = vadd.s32 %v362, 4294967256
        %v396 = vlaneseq
        %v397 = vshrl.u32 %v396, 7
        %v398 = vsub.s32 %v395, %v397
        %v399 = vrot.slane %v341, %v398
        %vm400 = vcmask 392512
        %v401 = vsel %vm400, %v399, %v394
        %v402 = vadd.s32 %v362, 4294967248
        %v403 = vlaneseq
        %v404 = vshrl.u32 %v403, 7
        %v405 = vsub.s32 %v402, %v404
        %v406 = vrot.slane %v342, %v405
        %vm407 = vcmask 458112
        %v408 = vsel %vm407, %v406, %v401
        %v409 = vadd.s32 %v362, 4294967240
        %v410 = vlaneseq
        %v411 = vshrl.u32 %v410, 7
        %v412 = vsub.s32 %v409, %v411
        %v413 = vrot.slane %v343, %v412
        %vm414 = vcmask 523712
        %v415 = vsel %vm414, %v413, %v408
        %vm416 = vcmask 523264
        %v417 = vsel %vm416, %v415, 0
        %419 = vmatprep.subr.mxu0 0.0
        %420 = vmatpush1.msra.mxu0 %v344
        %421 = vmatprep.subr.mxu0 0.0
        %422 = vmatpush1.msra.mxu0 %v345
        %423 = vmatprep.subr.mxu0 0.0
        %424 = vmatpush1.msra.mxu0 %v346
        %425 = vmatprep.subr.mxu0 0.0
        %426 = vmatpush1.msra.mxu0 %v347
        %427 = vmatprep.subr.mxu0 0.0
        %428 = vmatpush1.msra.mxu0 %v348
        %429 = vmatprep.subr.mxu0 0.0
        %430 = vmatpush1.msra.mxu0 %v349
        %431 = vmatprep.subr.mxu0 0.0
        %432 = vmatpush1.msra.mxu0 %v350
        %433 = vmatprep.subr.mxu0 0.0
        %434 = vmatpush1.msra.mxu0 %v351
        %435 = vmatprep.subr.mxu0 0.0
        %436 = vmatpush1.msra.mxu0 0.0
        %437 = vmatprep.subr.mxu0 0.0
        %438 = vmatpush1.msra.mxu0 0.0
        %439 = vmatprep.subr.mxu0 0.0
        %440 = vmatpush1.msra.mxu0 0.0
        %441 = vmatprep.subr.mxu0 0.0
        %442 = vmatpush1.msra.mxu0 0.0
        %443 = vmatprep.subr.mxu0 0.0
        %444 = vmatpush1.msra.mxu0 0.0
        %445 = vmatprep.subr.mxu0 0.0
        %446 = vmatpush1.msra.mxu0 0.0
        %447 = vmatprep.subr.mxu0 0.0
        %448 = vmatpush1.msra.mxu0 0.0
        %449 = vmatprep.subr.mxu0 0.0
        %450 = vmatpush1.msra.mxu0 0.0
        %451 = vmatprep.subr.mxu0 0.0
        %452 = vmatpush1.msra.mxu0 0.0
        %453 = vmatprep.subr.mxu0 0.0
        %454 = vmatpush1.msra.mxu0 0.0
        %455 = vmatprep.subr.mxu0 0.0
        %456 = vmatpush1.msra.mxu0 0.0
        %457 = vmatprep.subr.mxu0 0.0
        %458 = vmatpush1.msra.mxu0 0.0
        %459 = vmatprep.subr.mxu0 0.0
        %460 = vmatpush1.msra.mxu0 0.0
        %461 = vmatprep.subr.mxu0 0.0
        %462 = vmatpush1.msra.mxu0 0.0
        %463 = vmatprep.subr.mxu0 0.0
        %464 = vmatpush1.msra.mxu0 0.0
        %465 = vmatprep.subr.mxu0 0.0
        %466 = vmatpush1.msra.mxu0 0.0
        %467 = vmatprep.subr.mxu0 0.0
        %468 = vmatpush1.msra.mxu0 0.0
        %469 = vmatprep.subr.mxu0 0.0
        %470 = vmatpush1.msra.mxu0 0.0
        %471 = vmatprep.subr.mxu0 0.0
        %472 = vmatpush1.msra.mxu0 0.0
        %473 = vmatprep.subr.mxu0 0.0
        %474 = vmatpush1.msra.mxu0 0.0
        %475 = vmatprep.subr.mxu0 0.0
        %476 = vmatpush1.msra.mxu0 0.0
        %477 = vmatprep.subr.mxu0 0.0
        %478 = vmatpush1.msra.mxu0 0.0
        %479 = vmatprep.subr.mxu0 0.0
        %480 = vmatpush1.msra.mxu0 0.0
        %481 = vmatprep.subr.mxu0 0.0
        %482 = vmatpush1.msra.mxu0 0.0
        %483 = vmatprep.mubr.f32.mxu0 0.0
        %484 = vmatmul.mubr.f32.gmra.mrb[0].mxu0 %v417
        %v485 = vpop.f32.mrb[0].mxu0
        %v486 = vadd.f32 %v352, %v485
        %v487 = vpop.f32.mrb[0].mxu0
        %488 = vdwg.mxu0
        %v489 = vmax.f32 %v486, 0.0
        %v490 = vld [vmem:[#allocation8] sm:$0xf]
        %v491 = vld [vmem:[#allocation10] sm:$0x1]
        %vm492 = vcmask 31744
        %v494 = vsel %vm492, %v489, 0
        %vm496 = vcmask 1043456
        %v498 = vsel %vm496, %v490, 0
        %500 = vmatprep.subr.mxu0 0.0
        %501 = vmatpush1.msra.mxu0 %v498
        %502 = vmatprep.subr.mxu0 0.0
        %503 = vmatpush1.msra.mxu0 0.0
        %504 = vmatprep.subr.mxu0 0.0
        %505 = vmatpush1.msra.mxu0 0.0
        %506 = vmatprep.subr.mxu0 0.0
        %507 = vmatpush1.msra.mxu0 0.0
        %508 = vmatprep.subr.mxu0 0.0
        %509 = vmatpush1.msra.mxu0 0.0
        %510 = vmatprep.subr.mxu0 0.0
        %511 = vmatpush1.msra.mxu0 0.0
        %512 = vmatprep.subr.mxu0 0.0
        %513 = vmatpush1.msra.mxu0 0.0
        %514 = vmatprep.subr.mxu0 0.0
        %515 = vmatpush1.msra.mxu0 0.0
        %516 = vmatprep.subr.mxu0 0.0
        %517 = vmatpush1.msra.mxu0 0.0
        %518 = vmatprep.subr.mxu0 0.0
        %519 = vmatpush1.msra.mxu0 0.0
        %520 = vmatprep.subr.mxu0 0.0
        %521 = vmatpush1.msra.mxu0 0.0
        %522 = vmatprep.subr.mxu0 0.0
        %523 = vmatpush1.msra.mxu0 0.0
        %524 = vmatprep.subr.mxu0 0.0
        %525 = vmatpush1.msra.mxu0 0.0
        %526 = vmatprep.subr.mxu0 0.0
        %527 = vmatpush1.msra.mxu0 0.0
        %528 = vmatprep.subr.mxu0 0.0
        %529 = vmatpush1.msra.mxu0 0.0
        %530 = vmatprep.subr.mxu0 0.0
        %531 = vmatpush1.msra.mxu0 0.0
        %532 = vmatprep.subr.mxu0 0.0
        %533 = vmatpush1.msra.mxu0 0.0
        %534 = vmatprep.subr.mxu0 0.0
        %535 = vmatpush1.msra.mxu0 0.0
        %536 = vmatprep.subr.mxu0 0.0
        %537 = vmatpush1.msra.mxu0 0.0
        %538 = vmatprep.subr.mxu0 0.0
        %539 = vmatpush1.msra.mxu0 0.0
        %540 = vmatprep.subr.mxu0 0.0
        %541 = vmatpush1.msra.mxu0 0.0
        %542 = vmatprep.subr.mxu0 0.0
        %543 = vmatpush1.msra.mxu0 0.0
        %544 = vmatprep.subr.mxu0 0.0
        %545 = vmatpush1.msra.mxu0 0.0
        %546 = vmatprep.subr.mxu0 0.0
        %547 = vmatpush1.msra.mxu0 0.0
        %548 = vmatprep.subr.mxu0 0.0
        %549 = vmatpush1.msra.mxu0 0.0
        %550 = vmatprep.subr.mxu0 0.0
        %551 = vmatpush1.msra.mxu0 0.0
        %552 = vmatprep.subr.mxu0 0.0
        %553 = vmatpush1.msra.mxu0 0.0
        %554 = vmatprep.subr.mxu0 0.0
        %555 = vmatpush1.msra.mxu0 0.0
        %556 = vmatprep.subr.mxu0 0.0
        %557 = vmatpush1.msra.mxu0 0.0
        %558 = vmatprep.subr.mxu0 0.0
        %559 = vmatpush1.msra.mxu0 0.0
        %560 = vmatprep.subr.mxu0 0.0
        %561 = vmatpush1.msra.mxu0 0.0
        %562 = vmatprep.subr.mxu0 0.0
        %563 = vmatpush1.msra.mxu0 0.0
        %564 = vmatprep.mubr.f32.mxu0 0.0
        %565 = vmatmul.mubr.f32.gmra.mrb[0].mxu0 %v494
        %v566 = vpop.f32.mrb[0].mxu0
        %v567 = vadd.f32 %v491, %v566
        %v568 = vpop.f32.mrb[0].mxu0
        %569 = vdwg.mxu0
        %v570 = vxor.u32 %v567, 2147483648
        %v571 = vmul.f32 %v570, 1.442695
        %v572 = vpow.pop %v571
        %v573 = vadd.f32 %v572, 1.0
        %v574 = vrcp.pop %v573
        %v575 = vmul.f32 1.0, %v574
        %v576 = vlaneseq
        %v577 = vshrl.u32 %v576, 7
        %v578 = vsub.s32 0, %v577
        %v579 = vrot.slane %v575, %v578
        %581 = vbcast.lane.b32.xlu0 %v579, 256
        %v582 = vpop.permute.xlu0 %581
        %s584 = sor.u32 256, 8
        %585 = vbcast.lane.b32.xlu0 %v579, %s584
        %v586 = vpop.permute.xlu0 %585
        %s588 = sor.u32 256, 16
        %589 = vbcast.lane.b32.xlu0 %v579, %s588
        %v590 = vpop.permute.xlu0 %589
        %s592 = sor.u32 256, 24
        %593 = vbcast.lane.b32.xlu0 %v579, %s592
        %v594 = vpop.permute.xlu0 %593
        %s596 = sor.u32 256, 32
        %597 = vbcast.lane.b32.xlu0 %v579, %s596
        %v598 = vpop.permute.xlu0 %597
        %s600 = sor.u32 256, 40
        %601 = vbcast.lane.b32.xlu0 %v579, %s600
        %v602 = vpop.permute.xlu0 %601
        %s604 = sor.u32 256, 48
        %605 = vbcast.lane.b32.xlu0 %v579, %s604
        %v606 = vpop.permute.xlu0 %605
        %s608 = sor.u32 256, 56
        %609 = vbcast.lane.b32.xlu0 %v579, %s608
        %v610 = vpop.permute.xlu0 %609
        %v611 = vmul.f32 %v295, %v582
        %v612 = vmul.f32 %v296, %v582
        %v613 = vmul.f32 %v297, %v586
        %v614 = vmul.f32 %v298, %v586
        %v615 = vmul.f32 %v299, %v590
        %v616 = vmul.f32 %v300, %v590
        %v617 = vmul.f32 %v301, %v594
        %v618 = vmul.f32 %v302, %v594
        %v619 = vmul.f32 %v303, %v598
        %v620 = vmul.f32 %v304, %v598
        %v621 = vmul.f32 %v305, %v602
        %v622 = vmul.f32 %v306, %v602
        %v623 = vmul.f32 %v307, %v606
        %v624 = vmul.f32 %v308, %v606
        %v625 = vmul.f32 %v309, %v610
        %v626 = vmul.f32 %v310, %v610
        %627 = vst [vmem:[%s294] sm:$0xff] %v611
        %628 = vst [vmem:[%s294 + $0x8] sm:$0xff] %v612
        %629 = vst [vmem:[%s294 + $0x10] sm:$0xff] %v613
        %630 = vst [vmem:[%s294 + $0x18] sm:$0xff] %v614
        %631 = vst [vmem:[%s294 + $0x20] sm:$0xff] %v615
        %632 = vst [vmem:[%s294 + $0x28] sm:$0xff] %v616
        %633 = vst [vmem:[%s294 + $0x30] sm:$0xff] %v617
        %634 = vst [vmem:[%s294 + $0x38] sm:$0xff] %v618
        %635 = vst [vmem:[%s294 + $0x40] sm:$0xff] %v619
        %636 = vst [vmem:[%s294 + $0x48] sm:$0xff] %v620
        %637 = vst [vmem:[%s294 + $0x50] sm:$0xff] %v621
        %638 = vst [vmem:[%s294 + $0x58] sm:$0xff] %v622
        %639 = vst [vmem:[%s294 + $0x60] sm:$0xff] %v623
        %640 = vst [vmem:[%s294 + $0x68] sm:$0xff] %v624
        %641 = vst [vmem:[%s294 + $0x70] sm:$0xff] %v625
        %642 = vst [vmem:[%s294 + $0x78] sm:$0xff] %v626
        %s643 = sand.u32 %s142, 1
        %s644 = scalar_lea.sflag [#allocation4], %s643
        %s645 = sand.u32 %s142, 1
        %s646 = smul.addr %s645, 128
        %s647 = scalar_lea.vmem [#allocation11], %s646
        // Predicated region
        $region61: #{tpu_custom_call.1} parent=39 // pred_check
          %p648 = pneg %p152
        $region62: #{tpu_custom_call.1} parent=39 // pred_check_branch
          %650 = sbr.rel (%p648) target = $region64
        $region63: #{tpu_custom_call.1} parent=39 // pred_region
          %s652 = ssub.s32 2048, 2048
          %653 = vsyncadd %s644, %s652
          %s654 = smul.addr %s24, 16
          %s655 = smul.addr %s654, 128
          %s656 = scalar_lea.hbm %s5, %s655
          %s657 = sshll.u32 %s647, 4
          %s658 = int_to_ptr.vmem [resolvable:$true] %s657
          %663 = dma.vmem_to_hbm [thread:$0]  %s658, 2048, %s656, %s644, 256, 256, 16
        $region64: #{tpu_custom_call.1} parent=39 // pred_fallthru
          _
      $region40: #{tpu_custom_call.1} parent=5 // pred_fallthru
        _
      %p664 = scmp.le.s32.totalorder 2, %s19
      // Predicated region
      $region65: #{tpu_custom_call.1} parent=5 // pred_check
        %p665 = pneg %p664
      $region66: #{tpu_custom_call.1} parent=5 // pred_check_branch
        %667 = sbr.rel (%p665) target = $region68
      $region67: #{tpu_custom_call.1} parent=5 // pred_region
        %s668 = ssub.s32 %s19, 2
        // Predicated region
        $region69: #{tpu_custom_call.1} parent=67 // pred_check
          %p669 = pneg %p158
        $region70: #{tpu_custom_call.1} parent=67 // pred_check_branch
          %671 = sbr.rel (%p669) target = $region72
        $region71: #{tpu_custom_call.1} parent=67 // pred_region
          %s672 = sand.u32 %s143, 1
          %s673 = scalar_lea.sflag [#allocation4], %s672
          %s674 = sand.u32 %s143, 1
          %s675 = smul.addr %s674, 128
          %s676 = scalar_lea.vmem [#allocation11], %s675
          %677 = dma.done %s673, 2048
        $region72: #{tpu_custom_call.1} parent=67 // pred_fallthru
          _
      $region68: #{tpu_custom_call.1} parent=5 // pred_fallthru
        _
    $region6: #{tpu_custom_call.1} parent=1 // loop_footer
      %s23 = sadd.s32 1, %s19
    $region7: #{tpu_custom_call.1} parent=1 // loop_footer_branch
      %18 = sbr.rel target = $region3
    $region8: #{tpu_custom_call.1} parent=1 // loop_exit
      _
    %678 = vsyncpa [#allocation3], 1
    %s679 = scalar_lea.sflag [#allocation3], 1
    %680 = vsyncpa %s679, 1
    %681 = vsyncpa [#allocation6], 1
    %682 = vsyncpa [#allocation9], 1
    %683 = vsyncpa [#allocation4], 1
    %s684 = scalar_lea.sflag [#allocation4], 1
    %685 = vsyncpa %s684, 1

</llo_original>
